<compile_context>
chip_gen: v5e
topology: v5e:2x2
jax: 0.10.0
libtpu: 0.0.40
codegen_flags: <defaults>
</compile_context>

<pallas_src>
import functools

import numpy as np
import jax
import jax.numpy as jnp
from jax.experimental import pallas as pl
from jax.experimental.pallas import tpu as pltpu

LEAKY_SLOPE = 0.01
BN_EPS = 1e-5


def _round_up(x, m):
    return ((x + m - 1) // m) * m


@functools.cache
def _roll_shift_sign():
    """One-time self-check of pltpu.roll's rotation direction.

    Returns sign s such that
      pltpu.roll(x, shift=(s * off) % n, axis=-1)[..., p] == x[..., (p + off) % n]
    so the main kernel is correct regardless of the roll convention.
    """
    def probe_kernel(x_ref, o_ref):
        o_ref[...] = pltpu.roll(x_ref[...], shift=1, axis=1)

    x = jnp.tile(jnp.arange(256, dtype=jnp.float32)[None, :], (8, 1))
    rolled = pl.pallas_call(
        probe_kernel,
        out_shape=jax.ShapeDtypeStruct((8, 256), jnp.float32),
    )(x)
    # jnp.roll convention: roll(x, 1)[..., 1] == x[..., 0] == 0.
    return -1 if int(rolled[0, 1]) == 0 else 1


def _double_conv_kernel(x_ref, m_ref, w1_ref, s1_ref, w2_ref, s2_ref,
                        o_ref, patch_ref, *, width, roll_sign):
    """One batch element, both conv layers. Pixels live on the lane axis.

    x_ref:     (1, Cin_p, HW)      f32 input (channels-first, flattened pixels)
    m_ref:     (9, 1, HW)          f32 validity mask per 3x3 tap
    w1_ref:    (Cout_p, 9*Cin_p)   bf16 layer-1 weights (BN scale folded in)
    s1_ref:    (Cout_p, 1)         f32 layer-1 shift (conv bias + BN folded)
    w2_ref:    (Cout_p, 9*Cout_p)  bf16 layer-2 weights
    s2_ref:    (Cout_p, 1)         f32 layer-2 shift
    o_ref:     (1, Cout_p, HW)     f32 output (lane-dense store, HW >= 128)
    patch_ref: (9*max(Cin_p,Cout_p), HW) f32 scratch: im2col patch matrix
    """
    hw = x_ref.shape[-1]

    def conv_bn_lrelu(inp, w_ref, s_ref):
        c = inp.shape[0]
        # im2col: tap t=(dy,dx) is the image shifted by (dy-1)*W + (dx-1)
        # along the flattened pixel axis, out-of-image pixels masked to 0.
        for t in range(9):
            dy, dx = divmod(t, 3)
            off = (dy - 1) * width + (dx - 1)
            if off == 0:
                shifted = inp
            else:
                shifted = pltpu.roll(inp, shift=(roll_sign * off) % hw, axis=1)
            patch_ref[t * c:(t + 1) * c, :] = shifted * m_ref[t]
        # Single deep-K matmul per layer on the MXU (bf16 in, f32 accumulate).
        patches = patch_ref[0:9 * c, :].astype(jnp.bfloat16)
        acc = jnp.dot(w_ref[...], patches, preferred_element_type=jnp.float32)
        y = acc + s_ref[...]                      # (Cout_p, HW), f32 epilogue
        return jnp.where(y > 0, y, LEAKY_SLOPE * y)

    y1 = conv_bn_lrelu(x_ref[0], w1_ref, s1_ref)  # intermediate stays on-chip
    y2 = conv_bn_lrelu(y1, w2_ref, s2_ref)
    o_ref[0] = y2.astype(o_ref.dtype)


def _fold_layer(w_hwio, bias, gamma, beta, run_mean, run_var, *, cin_p, cout_p):
    """Fold conv bias + BatchNorm (eval mode) into weights and a per-channel shift."""
    cin, cout = w_hwio.shape[2], w_hwio.shape[3]
    inv_std = 1.0 / jnp.sqrt(run_var + BN_EPS)
    scale = gamma * inv_std                                    # (Cout,)
    shift = beta + (bias - run_mean) * scale                   # (Cout,)
    w = w_hwio * scale[None, None, None, :]                    # fold BN scale
    w = jnp.pad(w, ((0, 0), (0, 0), (0, cin_p - cin), (0, 0)))
    # (3,3,Cin_p,Cout) -> (Cout, 9*Cin_p); column index = (dy*3+dx)*Cin_p + ci
    wmat = jnp.transpose(w, (3, 0, 1, 2)).reshape(cout, 9 * cin_p)
    wmat = jnp.pad(wmat, ((0, cout_p - cout), (0, 0))).astype(jnp.bfloat16)
    shift = jnp.pad(shift, (0, cout_p - cout)).reshape(cout_p, 1)
    return wmat, shift.astype(jnp.float32)


def _tap_masks(h, w):
    """(9, 1, H*W) 0/1 mask: tap (dy,dx) valid iff the neighbor is inside the image."""
    p = np.arange(h * w)
    r, c = p // w, p % w
    masks = np.zeros((9, 1, h * w), np.float32)
    for t in range(9):
        dy, dx = divmod(t, 3)
        rr, cc = r + dy - 1, c + dx - 1
        masks[t, 0] = ((rr >= 0) & (rr < h) & (cc >= 0) & (cc < w)).astype(np.float32)
    return jnp.asarray(masks)


def double_conv(x_nchw, params):
    """DoubleConv forward: (conv3x3 => BN => LeakyReLU) * 2. NCHW in, NCHW out."""
    n, cin, h, w = x_nchw.shape
    cout = params[0][0].shape[-1]
    hw = h * w
    cin_p = _round_up(cin, 8)      # pad channels to the f32 sublane tile
    cout_p = _round_up(cout, 8)

    w1, s1 = _fold_layer(*params[0], cin_p=cin_p, cout_p=cout_p)
    w2, s2 = _fold_layer(*params[1], cin_p=cout_p, cout_p=cout_p)
    masks = _tap_masks(h, w)

    # Channels-first, pixels flattened onto the lane axis. No transposes, no
    # spatial padding in HBM.
    x = jnp.pad(x_nchw.astype(jnp.float32),
                ((0, 0), (0, cin_p - cin), (0, 0), (0, 0)))
    x = x.reshape(n, cin_p, hw)

    kernel = functools.partial(_double_conv_kernel, width=w,
                               roll_sign=_roll_shift_sign())

    out = pl.pallas_call(
        kernel,
        out_shape=jax.ShapeDtypeStruct((n, cout_p, hw), jnp.float32),
        grid_spec=pltpu.PrefetchScalarGridSpec(
            num_scalar_prefetch=0,
            grid=(n,),
            in_specs=[
                pl.BlockSpec((1, cin_p, hw), lambda i: (i, 0, 0)),     # x
                pl.BlockSpec((9, 1, hw), lambda i: (0, 0, 0)),         # tap masks
                pl.BlockSpec((cout_p, 9 * cin_p), lambda i: (0, 0)),   # w1
                pl.BlockSpec((cout_p, 1), lambda i: (0, 0)),           # shift1
                pl.BlockSpec((cout_p, 9 * cout_p), lambda i: (0, 0)),  # w2
                pl.BlockSpec((cout_p, 1), lambda i: (0, 0)),           # shift2
            ],
            out_specs=pl.BlockSpec((1, cout_p, hw), lambda i: (i, 0, 0)),
            scratch_shapes=[
                pltpu.VMEM((9 * max(cin_p, cout_p), hw), jnp.float32),  # im2col
            ],
        ),
        compiler_params=pltpu.CompilerParams(
            dimension_semantics=("parallel",)),
    )(x, masks, w1, s1, w2, s2)

    return out[:, :cout, :].reshape(n, cout, h, w)


def init_params(key, in_channels, out_channels):
    """Deterministic synthetic parameters matching nn.Conv2d/BatchNorm2d shapes."""
    def layer(k, cin, cout):
        k1, k2, k3, k4, k5, k6 = jax.random.split(k, 6)
        w = jax.random.normal(k1, (3, 3, cin, cout), jnp.float32) * 0.1  # HWIO
        b = jax.random.normal(k2, (cout,), jnp.float32) * 0.1
        gamma = 1.0 + 0.1 * jax.random.normal(k3, (cout,), jnp.float32)
        beta = 0.1 * jax.random.normal(k4, (cout,), jnp.float32)
        run_mean = 0.1 * jax.random.normal(k5, (cout,), jnp.float32)
        run_var = jnp.abs(jax.random.normal(k6, (cout,), jnp.float32)) + 0.5
        return (w, b, gamma, beta, run_mean, run_var)

    ka, kb = jax.random.split(key)
    return (layer(ka, in_channels, out_channels),
            layer(kb, out_channels, out_channels))


def _reference(x_nchw, params):
    """Pure-JAX f32 reference (lax conv) for a correctness sanity check."""
    x = x_nchw
    for (w, b, gamma, beta, rm, rv) in params:
        w_oihw = jnp.transpose(w, (3, 2, 0, 1))
        y = jax.lax.conv_general_dilated(
            x, w_oihw, window_strides=(1, 1), padding=((1, 1), (1, 1)),
            dimension_numbers=("NCHW", "OIHW", "NCHW"))
        y = y + b[None, :, None, None]
        y = (y - rm[None, :, None, None]) / jnp.sqrt(rv[None, :, None, None] + BN_EPS)
        y = y * gamma[None, :, None, None] + beta[None, :, None, None]
        x = jnp.where(y > 0, y, LEAKY_SLOPE * y)
    return x


if __name__ == "__main__":
    key = jax.random.PRNGKey(0)
    k_x, k_p = jax.random.split(key)

    N, Cin, Cout, H, W = 2, 4, 8, 16, 16
    x = jax.random.normal(k_x, (N, Cin, H, W), jnp.float32)
    params = init_params(k_p, Cin, Cout)

    out = jax.block_until_ready(double_conv(x, params))
    ref = _reference(x, params)

    assert out.shape == (N, Cout, H, W)
    # Tolerance loosened vs. the pure-f32 version because the matmul operands
    # are bf16 (f32 accumulation / epilogue), per the performance review.
    err = float(jnp.max(jnp.abs(out - ref)))
    assert jnp.allclose(out, ref, atol=5e-2, rtol=5e-2), f"max abs err {err}"

    print("KERNEL_OK")
</pallas_src>

<mosaic_0001>
module attributes {stable_mosaic.version = 11 : i64} {
  func.func @probe_kernel(%arg0: memref<8x256xf32, #tpu.memory_space<vmem>>, %arg1: memref<8x256xf32, #tpu.memory_space<vmem>>) attributes {dimension_semantics = [], scalar_prefetch = 0 : i64, scratch_operands = 0 : i64, tpu.core_type = #tpu.core_type<tc>} {
    %c0 = arith.constant 0 : index
    %c0_0 = arith.constant 0 : index
    %0 = vector.load %arg0[%c0, %c0_0] : memref<8x256xf32, #tpu.memory_space<vmem>>, vector<8x256xf32>
    %c1_i32 = arith.constant 1 : i32
    %1 = tpu.dynamic_rotate %0 by %c1_i32 dim 1 : vector<8x256xf32>, i32 -> vector<8x256xf32>
    %c0_1 = arith.constant 0 : index
    %c0_2 = arith.constant 0 : index
    %2 = vector.load %arg1[%c0_1, %c0_2] : memref<8x256xf32, #tpu.memory_space<vmem>>, vector<8x256xf32>
    tpu.vector_store %arg1[%c0_1, %c0_2], %1 {strides = array<i32>} : memref<8x256xf32, #tpu.memory_space<vmem>>, vector<8x256xf32>,
    return
  }
}

</mosaic_0001>

<llo_original>
// kernel: tpu_custom_call.1
$region0: #{tpu_custom_call.1}
  #allocation0 [shape = 'u32[]', space=smem, size = 0x4, offset = 0x4, fixed_abs, tag = 'smem constant byte address 0x4 - core index']
  #allocation1 [shape = 'u32[72,128]{1,0:T(1,128)}', space=vmem, size = 0x9000, scoped, tag = 'internal scratch']
  %s0 = inlined_call_operand.hbm [shape: f32[8,256], index: 0, kind: input, shape index: {}]
  %s1 = inlined_call_operand.hbm [shape: f32[8,256], index: 1, kind: output, shape index: {}]
  %s2 = sld [smem:[#allocation0]]
  $region18: #{tpu_custom_call.1} parent=0
    _
  %s4 = ssub.s32 1, %s2
  %s5 = scalar_select 0, %s4, %s2
  $region1: #{tpu_custom_call.1} parent=0
    #allocation2 [shape = 'u8[8192]{0}', space=vmem, size = 0x2000, scoped, tag = 'input window, operand 0, single buffered']
    #allocation3 [shape = 's32[1]{0}', space=sflag, size = 0x4, scoped, tag = 'scoped memory for tpu_custom_call.1']
    #allocation4 [shape = 's32[1]{0}', space=sflag, size = 0x4, scoped, tag = 'scoped memory for tpu_custom_call.1']
    #allocation5 [shape = 'u8[8192]{0}', space=vmem, size = 0x2000, scoped, tag = 'output window, operand 0, single buffered']
    %6 = vsyncpa [#allocation3], 0
    %7 = vsyncpa [#allocation4], 0
    // Predicated region
    $region2: #{tpu_custom_call.1} parent=1 // pred_check
      _
    $region3: #{tpu_custom_call.1} parent=1 // pred_check_branch
      %9 = sbr.rel (0) target = $region5
    $region4: #{tpu_custom_call.1} parent=1 // pred_region
      %11 = vsyncadd [#allocation3], 0
      %s13 = sshll.u32 %s0, 4
      %s14 = int_to_ptr.hbm [resolvable:$true] %s13
      %s15 = sshll.u32 [#allocation2], 4
      %s16 = int_to_ptr.vmem [resolvable:$true] %s15
      %18 = dma.hbm_to_vmem [thread:$0]  %s14, 256, %s16, [#allocation3]
    $region5: #{tpu_custom_call.1} parent=1 // pred_fallthru
      _
    // Predicated region
    $region6: #{tpu_custom_call.1} parent=1 // pred_check
      _
    $region7: #{tpu_custom_call.1} parent=1 // pred_check_branch
      %20 = sbr.rel (0) target = $region9
    $region8: #{tpu_custom_call.1} parent=1 // pred_region
      %22 = dma.done [#allocation3], 256
    $region9: #{tpu_custom_call.1} parent=1 // pred_fallthru
      _
    %v23 = vld [vmem:[#allocation2] sm:$0xff]
    %v24 = vld [vmem:[#allocation2 + $0x8] sm:$0xff]
    %25 = vrot.lane.b32.xlu0 %v23, 1
    %v26 = vpop.permute.xlu0 %25
    %27 = vrot.lane.b32.xlu0 %v24, 1
    %v28 = vpop.permute.xlu0 %27
    %v29 = vlaneseq
    %v30 = vand.u32 %v29, 127
    %vm31 = vcmp.lt.s32.totalorder %v30, 1
    %v32 = vsel %vm31, %v26, %v28
    %v33 = vsel %vm31, %v28, %v26
    %34 = vst [vmem:[#allocation5] sm:$0xff] %v33
    %35 = vst [vmem:[#allocation5 + $0x8] sm:$0xff] %v32
    // Predicated region
    $region10: #{tpu_custom_call.1} parent=1 // pred_check
      _
    $region11: #{tpu_custom_call.1} parent=1 // pred_check_branch
      %37 = sbr.rel (0) target = $region13
    $region12: #{tpu_custom_call.1} parent=1 // pred_region
      %39 = vsyncadd [#allocation4], 0
      %s41 = sshll.u32 [#allocation5], 4
      %s42 = int_to_ptr.vmem [resolvable:$true] %s41
      %s43 = sshll.u32 %s1, 4
      %s44 = int_to_ptr.hbm [resolvable:$true] %s43
      %46 = dma.vmem_to_hbm [thread:$0]  %s42, 256, %s44, [#allocation4]
    $region13: #{tpu_custom_call.1} parent=1 // pred_fallthru
      _
    // Predicated region
    $region14: #{tpu_custom_call.1} parent=1 // pred_check
      _
    $region15: #{tpu_custom_call.1} parent=1 // pred_check_branch
      %48 = sbr.rel (0) target = $region17
    $region16: #{tpu_custom_call.1} parent=1 // pred_region
      %50 = dma.done [#allocation4], 256
    $region17: #{tpu_custom_call.1} parent=1 // pred_fallthru
      _
    %51 = vsyncpa [#allocation3], 1
    %52 = vsyncpa [#allocation4], 1

</llo_original>
